<compile_context>
chip_gen: v5e
topology: v5e:2x2
jax: 0.10.0
libtpu: 0.0.40
codegen_flags: <defaults>
</compile_context>

<pallas_src>
import jax
import jax.numpy as jnp
from jax.experimental import pallas as pl
from jax.experimental.pallas import tpu as pltpu

S_DIM, A_DIM, HIDDEN, OUT_DIM = 4, 1, 40, 1
BIAS_COL = S_DIM + A_DIM          # column 5 of the fused input = constant 1
IN_REAL = S_DIM + A_DIM + 1       # 6 real rows of the fused/augmented input
IN_P = 8                          # padded fused input dim  (6 -> 8, sublane aligned)
HID_P = 128                       # padded hidden dim       (40 -> 128, lane/MXU aligned)
ONE_UNIT = HIDDEN                 # padded hidden unit #40 carries the constant 1 for b2


def _net_kernel(x_ref, w1_ref, w2_ref, o_ref):
    # x_ref : (IN_P,  TILE_B)  fused [s; a; 1; 0; 0] with batch on the lane axis
    # w1_ref: (HID_P, IN_P)    fused [W1s; W1a; b1]^T + constant-1 unit, zero padded
    # w2_ref: (OUT_DIM, HID_P) [W2^T, b2] routed through the constant-1 unit
    # o_ref : (OUT_DIM, TILE_B) lane-dense stores
    h = jnp.maximum(
        jnp.dot(w1_ref[...], x_ref[...], preferred_element_type=jnp.float32), 0.0
    )
    o_ref[...] = jnp.dot(w2_ref[...], h, preferred_element_type=jnp.float32)


def prepare_params(params):
    """One-time transform: fuse fc1 branches + biases, transpose, zero-pad."""
    w1s, b1s, w1a, b1a, w2, b2 = params            # weights (in,out), biases (1,out)
    w1_t = jnp.zeros((HID_P, IN_P), jnp.float32)
    w1_t = w1_t.at[:HIDDEN, :S_DIM].set(w1s.T)                      # fc1_s weights
    w1_t = w1_t.at[:HIDDEN, S_DIM].set(w1a.reshape(-1))             # fc1_a weights
    w1_t = w1_t.at[:HIDDEN, BIAS_COL].set((b1s + b1a).reshape(-1))  # fused fc1 bias
    w1_t = w1_t.at[ONE_UNIT, BIAS_COL].set(1.0)                     # constant-1 hidden unit
    w2_t = jnp.zeros((OUT_DIM, HID_P), jnp.float32)
    w2_t = w2_t.at[:, :HIDDEN].set(w2.T)                            # fc2 weights
    w2_t = w2_t.at[0, ONE_UNIT].set(b2.reshape(()))                 # fc2 bias via const-1 unit
    return (w1_t, w2_t)


def net_forward(s, a, kernel_params, *, tile_b=1024):
    """s: (B, 4) f32, a: (B, 1) f32  ->  (B, 1) f32."""
    w1_t, w2_t = kernel_params
    B = s.shape[0]

    # Lane axis (last dim) wants multiples of 128; don't over-pad tiny batches.
    tile_b = max(128, min(tile_b, ((pl.next_power_of_2(B) + 127) // 128) * 128))
    b_pad = pl.cdiv(B, tile_b) * tile_b

    # Fuse s / a / constant-1 and put batch on the lane axis (wrapper-side plumbing).
    # Padded batch columns are all-zero (incl. the ones column) -> padded outputs are 0.
    x = jnp.concatenate(
        [s.astype(jnp.float32), a.astype(jnp.float32), jnp.ones((B, 1), jnp.float32)],
        axis=1,
    )                                                              # (B, 6)
    x = jnp.pad(x, ((0, b_pad - B), (0, IN_P - IN_REAL))).T         # (IN_P, b_pad)

    out_t = pl.pallas_call(
        _net_kernel,
        out_shape=jax.ShapeDtypeStruct((OUT_DIM, b_pad), jnp.float32),
        grid=(b_pad // tile_b,),
        in_specs=[
            pl.BlockSpec((IN_P, tile_b), lambda i: (0, i)),      # x: streamed over batch
            pl.BlockSpec((HID_P, IN_P), lambda i: (0, 0)),       # W1 slab (VMEM resident)
            pl.BlockSpec((OUT_DIM, HID_P), lambda i: (0, 0)),    # W2 slab (VMEM resident)
        ],
        out_specs=pl.BlockSpec((OUT_DIM, tile_b), lambda i: (0, i)),
        compiler_params=pltpu.CompilerParams(
            dimension_semantics=("parallel",)),                  # v7x: both TensorCores
    )(x, w1_t, w2_t)

    return out_t[:, :B].T                                        # back to (B, 1)


def init_params(key):
    """PyTorch nn.Linear-style init: U[-1/sqrt(fan_in), 1/sqrt(fan_in)], weights (in,out)."""
    ks = jax.random.split(key, 6)

    def lin(kw, kb, fan_in, fan_out):
        bound = 1.0 / jnp.sqrt(float(fan_in))
        w = jax.random.uniform(kw, (fan_in, fan_out), jnp.float32, -bound, bound)
        b = jax.random.uniform(kb, (1, fan_out), jnp.float32, -bound, bound)
        return w, b

    w1s, b1s = lin(ks[0], ks[1], S_DIM, HIDDEN)
    w1a, b1a = lin(ks[2], ks[3], A_DIM, HIDDEN)
    w2, b2 = lin(ks[4], ks[5], HIDDEN, OUT_DIM)
    return (w1s, b1s, w1a, b1a, w2, b2)


def reference_forward(s, a, params):
    w1s, b1s, w1a, b1a, w2, b2 = params
    h = jnp.maximum(s @ w1s + b1s + a @ w1a + b1a, 0.0)
    return h @ w2 + b2


if __name__ == "__main__":
    key = jax.random.PRNGKey(0)
    k_p, k_s, k_a, k_s2, k_a2 = jax.random.split(key, 5)

    params = init_params(k_p)
    kparams = prepare_params(params)

    # Small-shape check (single 128-lane tile, batch padded with zeros).
    B = 8
    s = jax.random.normal(k_s, (B, S_DIM), jnp.float32)
    a = jax.random.normal(k_a, (B, A_DIM), jnp.float32)
    out = jax.block_until_ready(net_forward(s, a, kparams))
    ref = reference_forward(s, a, params)
    assert out.shape == (B, OUT_DIM)
    assert jnp.allclose(out, ref, atol=1e-5, rtol=1e-5)

    # Multi-tile check: exercises the batch grid (3 steps of 128 lanes) + padding.
    B2 = 300
    s2 = jax.random.normal(k_s2, (B2, S_DIM), jnp.float32)
    a2 = jax.random.normal(k_a2, (B2, A_DIM), jnp.float32)
    out2 = jax.block_until_ready(net_forward(s2, a2, kparams, tile_b=128))
    ref2 = reference_forward(s2, a2, params)
    assert out2.shape == (B2, OUT_DIM)
    assert jnp.allclose(out2, ref2, atol=1e-5, rtol=1e-5)

    print("KERNEL_OK")
</pallas_src>

<mosaic_0001>
module attributes {stable_mosaic.version = 11 : i64} {
  func.func @_net_kernel(%arg0: i32, %arg1: memref<8x128xf32, #tpu.memory_space<vmem>>, %arg2: memref<128x8xf32, #tpu.memory_space<vmem>>, %arg3: memref<1x128xf32, #tpu.memory_space<vmem>>, %arg4: memref<1x128xf32, #tpu.memory_space<vmem>>) attributes {dimension_semantics = [#tpu.dimension_semantics<parallel>], iteration_bounds = array<i64: 1>, scalar_prefetch = 0 : i64, scratch_operands = 0 : i64, tpu.core_type = #tpu.core_type<tc>, window_params = [{transform_indices = @transform_0, window_bounds = array<i64: 8, 128>}, {pipeline_mode = #tpu.pipeline_mode<synchronous>, transform_indices = @transform_1, window_bounds = array<i64: 128, 8>}, {pipeline_mode = #tpu.pipeline_mode<synchronous>, transform_indices = @transform_2, window_bounds = array<i64: 1, 128>}, {transform_indices = @transform_3, window_bounds = array<i64: 1, 128>}]} {
    %c0 = arith.constant 0 : index
    %c0_0 = arith.constant 0 : index
    %0 = vector.load %arg2[%c0, %c0_0] : memref<128x8xf32, #tpu.memory_space<vmem>>, vector<128x8xf32>
    %c0_1 = arith.constant 0 : index
    %c0_2 = arith.constant 0 : index
    %1 = vector.load %arg1[%c0_1, %c0_2] : memref<8x128xf32, #tpu.memory_space<vmem>>, vector<8x128xf32>
    %cst = arith.constant dense<0.000000e+00> : vector<128x128xf32>
    %2 = tpu.matmul %0, %1, %cst {dimension_numbers = #tpu.dot_dimension_numbers<[1], [0], [0], [1], [0, 0, 1, 1], [], []>} : vector<128x8xf32>, vector<8x128xf32>, vector<128x128xf32> -> vector<128x128xf32>
    %cst_3 = arith.constant 0.000000e+00 : f32
    %3 = vector.broadcast %cst_3 : f32 to vector<128x128xf32>
    %4 = arith.maximumf %2, %3 : vector<128x128xf32>
    %c0_4 = arith.constant 0 : index
    %c0_5 = arith.constant 0 : index
    %5 = vector.load %arg3[%c0_4, %c0_5] : memref<1x128xf32, #tpu.memory_space<vmem>>, vector<1x128xf32>
    %cst_6 = arith.constant dense<0.000000e+00> : vector<1x128xf32>
    %6 = tpu.matmul %5, %4, %cst_6 {dimension_numbers = #tpu.dot_dimension_numbers<[1], [0], [0], [1], [0, 0, 1, 1], [], []>} : vector<1x128xf32>, vector<128x128xf32>, vector<1x128xf32> -> vector<1x128xf32>
    %c0_7 = arith.constant 0 : index
    %c0_8 = arith.constant 0 : index
    %7 = vector.load %arg4[%c0_7, %c0_8] : memref<1x128xf32, #tpu.memory_space<vmem>>, vector<1x128xf32>
    tpu.vector_store %arg4[%c0_7, %c0_8], %6 {strides = array<i32>} : memref<1x128xf32, #tpu.memory_space<vmem>>, vector<1x128xf32>,
    return
  }
  func.func @transform_0(%arg0: i32) -> (i32, i32) {
    %c0_i32 = arith.constant 0 : i32
    %c0_i32_0 = arith.constant 0 : i32
    return %c0_i32, %arg0 : i32, i32
  }
  func.func @transform_1(%arg0: i32) -> (i32, i32) {
    %c0_i32 = arith.constant 0 : i32
    %c0_i32_0 = arith.constant 0 : i32
    %c0_i32_1 = arith.constant 0 : i32
    return %c0_i32, %c0_i32_0 : i32, i32
  }
  func.func @transform_2(%arg0: i32) -> (i32, i32) {
    %c0_i32 = arith.constant 0 : i32
    %c0_i32_0 = arith.constant 0 : i32
    %c0_i32_1 = arith.constant 0 : i32
    return %c0_i32, %c0_i32_0 : i32, i32
  }
  func.func @transform_3(%arg0: i32) -> (i32, i32) {
    %c0_i32 = arith.constant 0 : i32
    %c0_i32_0 = arith.constant 0 : i32
    return %c0_i32, %arg0 : i32, i32
  }
}

</mosaic_0001>

<llo_original>
// kernel: tpu_custom_call.1
$region0: #{tpu_custom_call.1}
  #allocation0 [shape = 'u32[]', space=smem, size = 0x4, offset = 0x4, fixed_abs, tag = 'smem constant byte address 0x4 - core index']
  #allocation1 [shape = 'u32[72,128]{1,0:T(1,128)}', space=vmem, size = 0x9000, scoped, tag = 'internal scratch']
  %s0 = inlined_call_operand.vmem [shape: f32[8,128], index: 0, kind: input, shape index: {}]
  %s1 = inlined_call_operand.vmem [shape: f32[128,8], index: 1, kind: input, shape index: {}]
  %s2 = inlined_call_operand.vmem [shape: f32[1,128], index: 2, kind: input, shape index: {}]
  %s3 = inlined_call_operand.hbm [shape: f32[1,128], index: 3, kind: output, shape index: {}]
  %s4 = sld [smem:[#allocation0]]
  $region22: #{tpu_custom_call.1} parent=0
    _
  %s6 = ssub.s32 1, %s4
  %s7 = scalar_select 0, %s6, %s4
  $region1: #{tpu_custom_call.1} parent=0
    #allocation2 [shape = 'u8[512]{0}', space=vmem, size = 0x400, scoped, tag = 'output window, operand 0, single buffered']
    #allocation3 [shape = 's32[1]{0}', space=sflag, size = 0x4, scoped, tag = 'scoped memory for tpu_custom_call.1']
    %8 = vsyncpa [#allocation3], 0
    // Predicated region
    $region2: #{tpu_custom_call.1} parent=1 // pred_check
      _
    $region3: #{tpu_custom_call.1} parent=1 // pred_check_branch
      %10 = sbr.rel (0) target = $region5
    $region4: #{tpu_custom_call.1} parent=1 // pred_region
      _
    $region5: #{tpu_custom_call.1} parent=1 // pred_fallthru
      _
    // Predicated region
    $region6: #{tpu_custom_call.1} parent=1 // pred_check
      _
    $region7: #{tpu_custom_call.1} parent=1 // pred_check_branch
      %12 = sbr.rel (0) target = $region9
    $region8: #{tpu_custom_call.1} parent=1 // pred_region
      _
    $region9: #{tpu_custom_call.1} parent=1 // pred_fallthru
      _
    // Predicated region
    $region10: #{tpu_custom_call.1} parent=1 // pred_check
      _
    $region11: #{tpu_custom_call.1} parent=1 // pred_check_branch
      %14 = sbr.rel (0) target = $region13
    $region12: #{tpu_custom_call.1} parent=1 // pred_region
      _
    $region13: #{tpu_custom_call.1} parent=1 // pred_fallthru
      _
    %v15 = vld [vmem:[%s1] sm:$0xff]
    %v16 = vld [vmem:[%s1 + $0x8] sm:$0xff]
    %v17 = vld [vmem:[%s1 + $0x10] sm:$0xff]
    %v18 = vld [vmem:[%s1 + $0x18] sm:$0xff]
    %v19 = vld [vmem:[%s1 + $0x20] sm:$0xff]
    %v20 = vld [vmem:[%s1 + $0x28] sm:$0xff]
    %v21 = vld [vmem:[%s1 + $0x30] sm:$0xff]
    %v22 = vld [vmem:[%s1 + $0x38] sm:$0xff]
    %v23 = vld [vmem:[%s1 + $0x40] sm:$0xff]
    %v24 = vld [vmem:[%s1 + $0x48] sm:$0xff]
    %v25 = vld [vmem:[%s1 + $0x50] sm:$0xff]
    %v26 = vld [vmem:[%s1 + $0x58] sm:$0xff]
    %v27 = vld [vmem:[%s1 + $0x60] sm:$0xff]
    %v28 = vld [vmem:[%s1 + $0x68] sm:$0xff]
    %v29 = vld [vmem:[%s1 + $0x70] sm:$0xff]
    %v30 = vld [vmem:[%s1 + $0x78] sm:$0xff]
    %v31 = vld [vmem:[%s0] sm:$0xff]
    %vm32 = vcmask 64512
    %v34 = vsel %vm32, %v15, 0
    %v37 = vsel %vm32, %v16, 0
    %v40 = vsel %vm32, %v17, 0
    %v43 = vsel %vm32, %v18, 0
    %v46 = vsel %vm32, %v19, 0
    %v49 = vsel %vm32, %v20, 0
    %v52 = vsel %vm32, %v21, 0
    %v55 = vsel %vm32, %v22, 0
    %v58 = vsel %vm32, %v23, 0
    %v61 = vsel %vm32, %v24, 0
    %v64 = vsel %vm32, %v25, 0
    %v67 = vsel %vm32, %v26, 0
    %v70 = vsel %vm32, %v27, 0
    %v73 = vsel %vm32, %v28, 0
    %v76 = vsel %vm32, %v29, 0
    %v79 = vsel %vm32, %v30, 0
    %81 = vmatpush.msra.mxu0 0.0
    %82 = vmatpush.msra.mxu0 0.0
    %83 = vmatpush.msra.mxu0 0.0
    %84 = vmatpush.msra.mxu0 0.0
    %85 = vmatpush.msra.mxu0 0.0
    %86 = vmatpush.msra.mxu0 0.0
    %87 = vmatpush.msra.mxu0 0.0
    %88 = vmatpush.msra.mxu0 0.0
    %89 = vmatpush.msra.mxu0 0.0
    %90 = vmatpush.msra.mxu0 0.0
    %91 = vmatpush.msra.mxu0 0.0
    %92 = vmatpush.msra.mxu0 0.0
    %93 = vmatpush.msra.mxu0 0.0
    %94 = vmatpush.msra.mxu0 0.0
    %95 = vmatpush.msra.mxu0 0.0
    %96 = vmatpush.msra.mxu0 %v31
    %97 = vmatmul.f32.gmra.mxu0 %v34
    %v98 = vpop.f32.mrf.mxu0
    %v99 = vadd.f32 0.0, %v98
    %100 = vmatmul.f32.gmra.mxu0 %v37
    %v101 = vpop.f32.mrf.mxu0
    %v102 = vadd.f32 0.0, %v101
    %103 = vmatmul.f32.gmra.mxu0 %v40
    %v104 = vpop.f32.mrf.mxu0
    %v105 = vadd.f32 0.0, %v104
    %106 = vmatmul.f32.gmra.mxu0 %v43
    %v107 = vpop.f32.mrf.mxu0
    %v108 = vadd.f32 0.0, %v107
    %109 = vmatmul.f32.gmra.mxu0 %v46
    %v110 = vpop.f32.mrf.mxu0
    %v111 = vadd.f32 0.0, %v110
    %112 = vmatmul.f32.gmra.mxu0 %v49
    %v113 = vpop.f32.mrf.mxu0
    %v114 = vadd.f32 0.0, %v113
    %115 = vmatmul.f32.gmra.mxu0 %v52
    %v116 = vpop.f32.mrf.mxu0
    %v117 = vadd.f32 0.0, %v116
    %118 = vmatmul.f32.gmra.mxu0 %v55
    %v119 = vpop.f32.mrf.mxu0
    %v120 = vadd.f32 0.0, %v119
    %121 = vmatmul.f32.gmra.mxu0 %v58
    %v122 = vpop.f32.mrf.mxu0
    %v123 = vadd.f32 0.0, %v122
    %124 = vmatmul.f32.gmra.mxu0 %v61
    %v125 = vpop.f32.mrf.mxu0
    %v126 = vadd.f32 0.0, %v125
    %127 = vmatmul.f32.gmra.mxu0 %v64
    %v128 = vpop.f32.mrf.mxu0
    %v129 = vadd.f32 0.0, %v128
    %130 = vmatmul.f32.gmra.mxu0 %v67
    %v131 = vpop.f32.mrf.mxu0
    %v132 = vadd.f32 0.0, %v131
    %133 = vmatmul.f32.gmra.mxu0 %v70
    %v134 = vpop.f32.mrf.mxu0
    %v135 = vadd.f32 0.0, %v134
    %136 = vmatmul.f32.gmra.mxu0 %v73
    %v137 = vpop.f32.mrf.mxu0
    %v138 = vadd.f32 0.0, %v137
    %139 = vmatmul.f32.gmra.mxu0 %v76
    %v140 = vpop.f32.mrf.mxu0
    %v141 = vadd.f32 0.0, %v140
    %142 = vmatmul.f32.gmra.mxu0 %v79
    %v143 = vpop.f32.mrf.mxu0
    %v144 = vadd.f32 0.0, %v143
    %145 = vdwg.mxu0
    %v146 = vmax.f32 %v99, 0.0
    %v147 = vmax.f32 %v102, 0.0
    %v148 = vmax.f32 %v105, 0.0
    %v149 = vmax.f32 %v108, 0.0
    %v150 = vmax.f32 %v111, 0.0
    %v151 = vmax.f32 %v114, 0.0
    %v152 = vmax.f32 %v117, 0.0
    %v153 = vmax.f32 %v120, 0.0
    %v154 = vmax.f32 %v123, 0.0
    %v155 = vmax.f32 %v126, 0.0
    %v156 = vmax.f32 %v129, 0.0
    %v157 = vmax.f32 %v132, 0.0
    %v158 = vmax.f32 %v135, 0.0
    %v159 = vmax.f32 %v138, 0.0
    %v160 = vmax.f32 %v141, 0.0
    %v161 = vmax.f32 %v144, 0.0
    %v162 = vld [vmem:[%s2] sm:$0x1]
    %163 = vmatpush.msra.mxu0 %v161
    %164 = vmatpush.msra.mxu0 %v160
    %165 = vmatpush.msra.mxu0 %v159
    %166 = vmatpush.msra.mxu0 %v158
    %167 = vmatpush.msra.mxu0 %v157
    %168 = vmatpush.msra.mxu0 %v156
    %169 = vmatpush.msra.mxu0 %v155
    %170 = vmatpush.msra.mxu0 %v154
    %171 = vmatpush.msra.mxu0 %v153
    %172 = vmatpush.msra.mxu0 %v152
    %173 = vmatpush.msra.mxu0 %v151
    %174 = vmatpush.msra.mxu0 %v150
    %175 = vmatpush.msra.mxu0 %v149
    %176 = vmatpush.msra.mxu0 %v148
    %177 = vmatpush.msra.mxu0 %v147
    %178 = vmatpush.msra.mxu0 %v146
    %179 = vmatmul.f32.gmra.mxu0 %v162
    %v180 = vpop.f32.mrf.mxu0
    %v181 = vadd.f32 0.0, %v180
    %182 = vdwg.mxu0
    %183 = vst [vmem:[#allocation2] sm:$0x1] %v181
    // Predicated region
    $region14: #{tpu_custom_call.1} parent=1 // pred_check
      _
    $region15: #{tpu_custom_call.1} parent=1 // pred_check_branch
      %185 = sbr.rel (0) target = $region17
    $region16: #{tpu_custom_call.1} parent=1 // pred_region
      %187 = vsyncadd [#allocation3], 0
      %s189 = sshll.u32 [#allocation2], 4
      %s190 = int_to_ptr.vmem [resolvable:$true] %s189
      %s191 = sshll.u32 %s3, 4
      %s192 = int_to_ptr.hbm [resolvable:$true] %s191
      %194 = dma.vmem_to_hbm [thread:$0]  %s190, 16, %s192, [#allocation3]
    $region17: #{tpu_custom_call.1} parent=1 // pred_fallthru
      _
    // Predicated region
    $region18: #{tpu_custom_call.1} parent=1 // pred_check
      _
    $region19: #{tpu_custom_call.1} parent=1 // pred_check_branch
      %196 = sbr.rel (0) target = $region21
    $region20: #{tpu_custom_call.1} parent=1 // pred_region
      %198 = dma.done [#allocation3], 16
    $region21: #{tpu_custom_call.1} parent=1 // pred_fallthru
      _
    %199 = vsyncpa [#allocation3], 1

</llo_original>
